<compile_context>
chip_gen: v6e
topology: v6e:2x2x1
jax: 0.10.0
libtpu: 0.0.40
codegen_flags: <defaults>
</compile_context>

<pallas_src>
import functools
from typing import Callable, Dict, List, NamedTuple

import jax
import jax.numpy as jnp
from jax.experimental import pallas as pl
from jax.experimental.pallas import tpu as pltpu

SEQ = 8       # sequence length of the (synthetic) text encoder
D_IN = 32     # token embedding width
HIDDEN = 32   # output embedding width
VOCAB = 256   # synthetic vocab size
LANE = 128    # TPU lane width


# ----------------------------- Pallas kernels ------------------------------

def _encode_kernel(x_ref, w_ref, o_ref):
    # x_ref: (R, 128) bf16, w_ref: (128, HIDDEN) bf16, o_ref: (R, HIDDEN) f32.
    # Single MXU pass, f32 accumulation.
    o_ref[...] = jnp.dot(
        x_ref[...], w_ref[...], preferred_element_type=jnp.float32
    ).astype(o_ref.dtype)


@jax.jit
def _encode_prompts_jit(token_ids, token_table, proj_w):
    """token_ids: [P, SEQ] int32 -> [P, SEQ, HIDDEN] f32.

    Gather + K-pad + bf16 cast + pallas matmul + reshape fused in one jit (one
    dispatch; runs once at init).  Only K is padded to 128; the (R, HIDDEN) output
    store is masked but this path is launch-bound, not store-bound.
    """
    P, S = token_ids.shape
    R = P * S
    tok_emb = jnp.take(token_table, token_ids.reshape(-1), axis=0)            # (R, D_IN)
    xp = jnp.pad(tok_emb, ((0, 0), (0, LANE - D_IN))).astype(jnp.bfloat16)    # (R, 128)
    wp = jnp.pad(proj_w, ((0, LANE - D_IN), (0, 0))).astype(jnp.bfloat16)     # (128, HIDDEN)
    out = pl.pallas_call(
        _encode_kernel,
        out_shape=jax.ShapeDtypeStruct((R, HIDDEN), jnp.float32),
    )(xp, wp)
    return out.reshape(P, S, HIDDEN)


def _direction_mask_kernel(front_thr, back_thr, overhead_thr, ele_ref, azi_ref, o_ref):
    # Thresholds are Python floats baked in at trace time (no SMEM DMA).
    # ele_ref / azi_ref: (1, Bp) degrees; o_ref: (4, Bp) int32
    # rows: 0=side (all True), 1=front, 2=back, 3=overhead.
    ele = ele_ref[...]
    azi = azi_ref[...]
    # shift_azimuth_deg: (azi + 180) % 360 - 180  -> [-180, 180), matches torch %.
    shifted = jnp.mod(azi + 180.0, 360.0) - 180.0
    o_ref[0:1, :] = jnp.ones_like(ele, dtype=jnp.int32)
    o_ref[1:2, :] = ((shifted > -front_thr) & (shifted < front_thr)).astype(jnp.int32)
    o_ref[2:3, :] = ((shifted > 180.0 - back_thr) |
                     (shifted < -180.0 + back_thr)).astype(jnp.int32)
    o_ref[3:4, :] = (ele > overhead_thr).astype(jnp.int32)


@functools.partial(jax.jit, static_argnames=("front_thr", "back_thr", "overhead_thr"))
def _direction_masks_jit(ele, azi, *, front_thr, back_thr, overhead_thr):
    """ele/azi: [1, B] (or [B]) float degrees -> bool masks [4, B].

    Reshape, lane-pad, pallas_call, un-pad slice and bool cast all fused under one
    jit => one XLA dispatch per camera batch.
    """
    ele2 = jnp.asarray(ele, jnp.float32).reshape(1, -1)
    azi2 = jnp.asarray(azi, jnp.float32).reshape(1, -1)
    B = ele2.shape[-1]
    Bp = pl.cdiv(B, LANE) * LANE
    ele_p = jnp.pad(ele2, ((0, 0), (0, Bp - B)))
    azi_p = jnp.pad(azi2, ((0, 0), (0, Bp - B)))
    kernel = functools.partial(
        _direction_mask_kernel, float(front_thr), float(back_thr), float(overhead_thr)
    )
    out = pl.pallas_call(
        kernel,
        out_shape=jax.ShapeDtypeStruct((4, Bp), jnp.int32),
        in_specs=[pl.BlockSpec(memory_space=pltpu.MemorySpace.VMEM),
                  pl.BlockSpec(memory_space=pltpu.MemorySpace.VMEM)],
        out_specs=pl.BlockSpec(memory_space=pltpu.MemorySpace.VMEM),
    )(ele_p, azi_p)
    return out[:, :B].astype(jnp.bool_)
    # NOTE(v7x): at B = O(10) a grid-less call on one TC is right; if B ever grows to
    # thousands of lanes, add a lane-dim grid with dimension_semantics=("parallel",).


def direction_masks(ele, azi, dis, *, front_thr, back_thr, overhead_thr):
    """DirectionConfig.condition semantics for all 4 directions in one launch.

    `dis` is accepted for API parity with the PyTorch lambdas but never used
    (and never DMA'd).
    """
    del dis
    return _direction_masks_jit(
        ele, azi,
        front_thr=float(front_thr), back_thr=float(back_thr),
        overhead_thr=float(overhead_thr),
    )


# ------------------------------ module glue --------------------------------

class DirectionConfig(NamedTuple):
    name: str
    prompt: Callable[[str], str]
    negative_prompt: Callable[[str], str]
    condition: Callable  # (ele, azi, dis) -> bool mask [1, B]


class PromptEmbedding(NamedTuple):
    text_embedding: jnp.ndarray                         # [1, SEQ, HIDDEN]
    uncond_text_embedding: jnp.ndarray                  # [1, SEQ, HIDDEN]
    text_embedding_view_dependent: jnp.ndarray          # [4, SEQ, HIDDEN]
    uncond_text_embedding_view_dependent: jnp.ndarray   # [4, SEQ, HIDDEN]
    directions: List[DirectionConfig]
    direction2idx: Dict[str, int]
    use_perp_negative: bool
    debug: bool


class Config:
    def __init__(self, **kw):
        self.__dict__.update(kw)

    def get(self, name, default=None):
        return getattr(self, name, default)


def _tokenize(prompt: str, seq: int = SEQ, vocab: int = VOCAB):
    """Deterministic synthetic tokenizer (rolling hash per word)."""
    ids = []
    for word in prompt.split(" "):
        h = 0
        for ch in word:
            h = (h * 31 + ord(ch)) % vocab
        ids.append(h)
    ids = ids[:seq] + [0] * max(0, seq - len(ids))
    return ids


class BasePromptProcessorPallas:
    """JAX/Pallas re-implementation of BasePromptProcessor's forward semantics."""

    def __init__(self, cfg: Config, key):
        self.cfg = cfg
        self.prompt = cfg.prompt
        self.negative_prompt = cfg.negative_prompt

        ft = float(cfg.front_threshold)
        bt = float(cfg.back_threshold)
        ot = float(cfg.overhead_threshold)

        # One kernel launch per camera batch: the four DirectionConfig.condition
        # lambdas slice rows of a single (4, B) mask.  The memo holds STRONG
        # references and compares object identity with `is`, so a stale-id cache
        # hit is impossible; under jit tracing (tracer objects differ) it simply
        # misses and each condition becomes its own (still fused) launch.
        self._mask_cache = None  # (ele_obj, azi_obj, masks)

        def cond_all(ele, azi, dis):
            c = self._mask_cache
            if c is not None and (c[0] is ele) and (c[1] is azi):
                return c[2]
            masks = direction_masks(ele, azi, dis,
                                    front_thr=ft, back_thr=bt, overhead_thr=ot)
            self._mask_cache = (ele, azi, masks)
            return masks

        self.get_direction_masks = cond_all  # public: (4, B) in one launch

        def row(i):
            return lambda ele, azi, dis: cond_all(ele, azi, dis)[i:i + 1, :]

        if cfg.view_dependent_prompt_front:
            self.directions = [
                DirectionConfig("side", lambda s: f"side view of {s}", lambda s: s, row(0)),
                DirectionConfig("front", lambda s: f"front view of {s}", lambda s: s, row(1)),
                DirectionConfig("back", lambda s: f"backside view of {s}", lambda s: s, row(2)),
                DirectionConfig("overhead", lambda s: f"overhead view of {s}", lambda s: s, row(3)),
            ]
        else:
            self.directions = [
                DirectionConfig("side", lambda s: f"{s}, side view", lambda s: s, row(0)),
                DirectionConfig("front", lambda s: f"{s}, front view", lambda s: s, row(1)),
                DirectionConfig("back", lambda s: f"{s}, back view", lambda s: s, row(2)),
                DirectionConfig("overhead", lambda s: f"{s}, overhead view", lambda s: s, row(3)),
            ]
        self.direction2idx = {d.name: i for i, d in enumerate(self.directions)}

        # TODO(synk): prompt debiasing (BertForMaskedLM + tokenizer) and disk caching
        # (torch.load/torch.save) have no Pallas equivalent; prompts are used directly.
        self.prompts_view_dependent = [
            d.prompt(self.cfg.get(f"prompt_{d.name}", None) or self.prompt)
            for d in self.directions
        ]
        self.negative_prompts_view_dependent = [
            d.negative_prompt(self.negative_prompt) for d in self.directions
        ]

        # ---- synthetic, deterministic "text encoder" parameters ----
        k_emb, k_proj = jax.random.split(key)
        self.token_table = (jax.random.normal(k_emb, (VOCAB, D_IN), jnp.float32) * 0.02)
        self.proj_w = jax.random.normal(k_proj, (D_IN, HIDDEN), jnp.float32) / jnp.sqrt(
            jnp.float32(D_IN)
        )

        self._prepare_prompt_embeddings()

    def _prepare_prompt_embeddings(self):
        prompts = (
            [self.prompt, self.negative_prompt]
            + self.prompts_view_dependent
            + self.negative_prompts_view_dependent
        )
        token_ids = jnp.asarray([_tokenize(p) for p in prompts], dtype=jnp.int32)  # [10, SEQ]
        emb = _encode_prompts_jit(token_ids, self.token_table, self.proj_w)         # [10, SEQ, H]

        self.text_embedding = emb[0:1]                                # [1, SEQ, HIDDEN]
        self.uncond_text_embedding = emb[1:2]                         # [1, SEQ, HIDDEN]
        self.text_embedding_view_dependent = emb[2:6]                 # [4, SEQ, HIDDEN]
        self.uncond_text_embedding_view_dependent = emb[6:10]         # [4, SEQ, HIDDEN]

    def get_prompt_embedding(self) -> PromptEmbedding:
        return PromptEmbedding(
            text_embedding=self.text_embedding,
            uncond_text_embedding=self.uncond_text_embedding,
            text_embedding_view_dependent=self.text_embedding_view_dependent,
            uncond_text_embedding_view_dependent=self.uncond_text_embedding_view_dependent,
            directions=self.directions,
            direction2idx=self.direction2idx,
            use_perp_negative=self.cfg.use_perp_negative,
            debug=self.cfg.debug,
        )

    def __call__(self) -> PromptEmbedding:
        return self.get_prompt_embedding()


# ---------------------------------- main ------------------------------------

if __name__ == "__main__":
    key = jax.random.PRNGKey(0)

    cfg = Config(
        prompt="a photo of a delicious hamburger",
        negative_prompt="ugly blurry low quality",
        view_dependent_prompt_front=False,
        front_threshold=30.0,
        back_threshold=30.0,
        overhead_threshold=60.0,
        use_perp_negative=False,
        debug=False,
        prompt_side=None,
        prompt_back=None,
        prompt_overhead=None,
        prompt_front=None,
    )

    proc = BasePromptProcessorPallas(cfg, key)
    pe = proc()  # forward()

    jax.block_until_ready(pe.text_embedding)
    assert pe.text_embedding.shape == (1, SEQ, HIDDEN)
    assert pe.uncond_text_embedding.shape == (1, SEQ, HIDDEN)
    assert pe.text_embedding_view_dependent.shape == (4, SEQ, HIDDEN)
    assert pe.uncond_text_embedding_view_dependent.shape == (4, SEQ, HIDDEN)
    assert pe.direction2idx == {"side": 0, "front": 1, "back": 2, "overhead": 3}

    # Exercise the DirectionConfig condition kernels on synthetic camera params.
    k1, k2, k3 = jax.random.split(key, 3)
    B = 8
    ele = jax.random.uniform(k1, (1, B), jnp.float32, minval=-90.0, maxval=90.0)
    azi = jax.random.uniform(k2, (1, B), jnp.float32, minval=-180.0, maxval=180.0)
    dis = jax.random.uniform(k3, (1, B), jnp.float32, minval=1.0, maxval=2.0)

    # All four conditions on the same batch share ONE fused pallas_call launch (memoized
    # by object identity with strong references, so no stale-id hazard).
    masks = [d.condition(ele, azi, dis) for d in proc.directions]
    jax.block_until_ready(masks)
    assert all(m.shape == (1, B) and m.dtype == jnp.bool_ for m in masks)

    # Cross-check masks against plain JAX (matches the PyTorch DirectionConfig lambdas).
    shifted = jnp.mod(azi + 180.0, 360.0) - 180.0
    ref_front = (shifted > -cfg.front_threshold) & (shifted < cfg.front_threshold)
    ref_back = (shifted > 180.0 - cfg.back_threshold) | (shifted < -180.0 + cfg.back_threshold)
    ref_over = ele > cfg.overhead_threshold
    assert bool(jnp.all(masks[0]))                      # "side" is all-True by definition
    assert bool(jnp.array_equal(masks[1], ref_front))
    assert bool(jnp.array_equal(masks[2], ref_back))
    assert bool(jnp.array_equal(masks[3], ref_over))

    # Cross-check the matmul hot path.  Kernel uses bf16 MXU inputs with f32
    # accumulation, so compare tightly against a bf16-cast reference and loosely
    # against the pure-f32 reference.
    tok = jnp.asarray([_tokenize(cfg.prompt)], dtype=jnp.int32)
    tok_emb = jnp.take(proc.token_table, tok, axis=0)                       # (1, SEQ, D_IN)
    ref_bf16 = (tok_emb.astype(jnp.bfloat16).astype(jnp.float32)
                @ proc.proj_w.astype(jnp.bfloat16).astype(jnp.float32))
    ref_f32 = tok_emb @ proc.proj_w
    assert bool(jnp.allclose(pe.text_embedding, ref_bf16, atol=1e-4))
    assert bool(jnp.allclose(pe.text_embedding, ref_f32, atol=5e-3))

    print("KERNEL_OK")
</pallas_src>

<mosaic_0001>
module attributes {stable_mosaic.version = 11 : i64} {
  func.func @_encode_kernel(%arg0: memref<80x128xbf16, #tpu.memory_space<vmem>>, %arg1: memref<128x32xbf16, #tpu.memory_space<vmem>>, %arg2: memref<80x32xf32, #tpu.memory_space<vmem>>) attributes {dimension_semantics = [], scalar_prefetch = 0 : i64, scratch_operands = 0 : i64, tpu.core_type = #tpu.core_type<tc>} {
    %c0 = arith.constant 0 : index
    %c0_0 = arith.constant 0 : index
    %0 = vector.load %arg0[%c0, %c0_0] : memref<80x128xbf16, #tpu.memory_space<vmem>>, vector<80x128xbf16>
    %c0_1 = arith.constant 0 : index
    %c0_2 = arith.constant 0 : index
    %1 = vector.load %arg1[%c0_1, %c0_2] : memref<128x32xbf16, #tpu.memory_space<vmem>>, vector<128x32xbf16>
    %cst = arith.constant dense<0.000000e+00> : vector<80x32xf32>
    %2 = tpu.matmul %0, %1, %cst {dimension_numbers = #tpu.dot_dimension_numbers<[1], [0], [0], [1], [0, 0, 1, 1], [], []>} : vector<80x128xbf16>, vector<128x32xbf16>, vector<80x32xf32> -> vector<80x32xf32>
    %c0_3 = arith.constant 0 : index
    %c0_4 = arith.constant 0 : index
    %3 = vector.load %arg2[%c0_3, %c0_4] : memref<80x32xf32, #tpu.memory_space<vmem>>, vector<80x32xf32>
    tpu.vector_store %arg2[%c0_3, %c0_4], %2 {strides = array<i32>} : memref<80x32xf32, #tpu.memory_space<vmem>>, vector<80x32xf32>,
    return
  }
}

</mosaic_0001>

<llo_original>
// kernel: _encode_prompts_jit.1
$region0: #{_encode_prompts_jit.1}
  #allocation0 [shape = 'u32[]', space=smem, size = 0x4, offset = 0x4, fixed_abs, tag = 'smem constant byte address 0x4 - core index']
  #allocation1 [shape = 'u32[144,128]{1,0:T(1,128)}', space=vmem, size = 0x12000, scoped, tag = 'internal scratch']
  %s0 = inlined_call_operand.vmem [shape: bf16[80,128], index: 0, kind: input, shape index: {}]
  %s1 = inlined_call_operand.vmem [shape: bf16[128,32], index: 1, kind: input, shape index: {}]
  %s2 = inlined_call_operand.hbm [shape: f32[80,32], index: 2, kind: output, shape index: {}]
  %s3 = sld [smem:[#allocation0]]
  $region18: #{_encode_prompts_jit.1} parent=0
    _
  %s5 = ssub.s32 1, %s3
  %s6 = scalar_select 0, %s5, %s3
  $region1: #{_encode_prompts_jit.1} parent=0
    #allocation2 [shape = 'u8[40960]{0}', space=vmem, size = 0xa000, scoped, tag = 'output window, operand 0, single buffered']
    #allocation3 [shape = 's32[1]{0}', space=sflag, size = 0x4, scoped, tag = 'scoped memory for _encode_prompts_jit.1']
    %7 = vsyncpa [#allocation3], 0
    // Predicated region
    $region2: #{_encode_prompts_jit.1} parent=1 // pred_check
      _
    $region3: #{_encode_prompts_jit.1} parent=1 // pred_check_branch
      %9 = sbr.rel (0) target = $region5
    $region4: #{_encode_prompts_jit.1} parent=1 // pred_region
      _
    $region5: #{_encode_prompts_jit.1} parent=1 // pred_fallthru
      _
    // Predicated region
    $region6: #{_encode_prompts_jit.1} parent=1 // pred_check
      _
    $region7: #{_encode_prompts_jit.1} parent=1 // pred_check_branch
      %11 = sbr.rel (0) target = $region9
    $region8: #{_encode_prompts_jit.1} parent=1 // pred_region
      _
    $region9: #{_encode_prompts_jit.1} parent=1 // pred_fallthru
      _
    %v13 = vld [vmem:[%s0] sm:$0xf]
    %v14 = vld [vmem:[%s0 + $0x4] sm:$0xf]
    %v15 = vld [vmem:[%s0 + $0x8] sm:$0xf]
    %v16 = vld [vmem:[%s0 + $0xc] sm:$0xf]
    %v17 = vld [vmem:[%s0 + $0x10] sm:$0xf]
    %v18 = vld [vmem:[%s0 + $0x14] sm:$0xf]
    %v19 = vld [vmem:[%s0 + $0x18] sm:$0xf]
    %v20 = vld [vmem:[%s0 + $0x1c] sm:$0xf]
    %v21 = vld [vmem:[%s0 + $0x20] sm:$0xf]
    %v22 = vld [vmem:[%s0 + $0x24] sm:$0xf]
    %v23 = vld [vmem:[%s1] sm:$0xf]
    %v24 = vld [vmem:[%s1 + $0x4] sm:$0xf]
    %v25 = vld [vmem:[%s1 + $0x8] sm:$0xf]
    %v26 = vld [vmem:[%s1 + $0xc] sm:$0xf]
    %v27 = vld [vmem:[%s1 + $0x10] sm:$0xf]
    %v28 = vld [vmem:[%s1 + $0x14] sm:$0xf]
    %v29 = vld [vmem:[%s1 + $0x18] sm:$0xf]
    %v30 = vld [vmem:[%s1 + $0x1c] sm:$0xf]
    %v31 = vld [vmem:[%s1 + $0x20] sm:$0xf]
    %v32 = vld [vmem:[%s1 + $0x24] sm:$0xf]
    %v33 = vld [vmem:[%s1 + $0x28] sm:$0xf]
    %v34 = vld [vmem:[%s1 + $0x2c] sm:$0xf]
    %v35 = vld [vmem:[%s1 + $0x30] sm:$0xf]
    %v36 = vld [vmem:[%s1 + $0x34] sm:$0xf]
    %v37 = vld [vmem:[%s1 + $0x38] sm:$0xf]
    %v38 = vld [vmem:[%s1 + $0x3c] sm:$0xf]
    %v49 = vunpack.c.l.b16 %v13
    %v50 = vunpack.c.l.b16 %v14
    %v51 = vunpack.c.l.b16 %v15
    %v52 = vunpack.c.l.b16 %v16
    %v53 = vunpack.c.l.b16 %v17
    %v54 = vunpack.c.l.b16 %v18
    %v55 = vunpack.c.l.b16 %v19
    %v56 = vunpack.c.l.b16 %v20
    %v57 = vunpack.c.l.b16 %v21
    %v58 = vunpack.c.l.b16 %v22
    %v59 = vpack.c.b16 %v50, %v49
    %v60 = vpack.c.b16 %v52, %v51
    %v61 = vpack.c.b16 %v54, %v53
    %v62 = vpack.c.b16 %v56, %v55
    %v63 = vpack.c.b16 %v58, %v57
    %v85 = vunpack.c.l.b16 %v23
    %v86 = vunpack.c.l.b16 %v24
    %v87 = vunpack.c.l.b16 %v25
    %v88 = vunpack.c.l.b16 %v26
    %v89 = vunpack.c.l.b16 %v27
    %v90 = vunpack.c.l.b16 %v28
    %v91 = vunpack.c.l.b16 %v29
    %v92 = vunpack.c.l.b16 %v30
    %v93 = vunpack.c.l.b16 %v31
    %v94 = vunpack.c.l.b16 %v32
    %v95 = vunpack.c.l.b16 %v33
    %v96 = vunpack.c.l.b16 %v34
    %v97 = vunpack.c.l.b16 %v35
    %v98 = vunpack.c.l.b16 %v36
    %v99 = vunpack.c.l.b16 %v37
    %v100 = vunpack.c.l.b16 %v38
    %v101 = vpack.c.b16 %v86, %v85
    %v102 = vpack.c.b16 %v88, %v87
    %v103 = vpack.c.b16 %v90, %v89
    %v104 = vpack.c.b16 %v92, %v91
    %v105 = vpack.c.b16 %v94, %v93
    %v106 = vpack.c.b16 %v96, %v95
    %v107 = vpack.c.b16 %v98, %v97
    %v108 = vpack.c.b16 %v100, %v99
    %117 = vmatprep.subr.bf16.mxu0 0
    %118 = vmatpush1.bf16.msra.mxu0 %v108
    %119 = vmatprep.subr.bf16.mxu0 0
    %120 = vmatpush1.bf16.msra.mxu0 %v107
    %121 = vmatprep.subr.bf16.mxu0 0
    %122 = vmatpush1.bf16.msra.mxu0 %v106
    %123 = vmatprep.subr.bf16.mxu0 0
    %124 = vmatpush1.bf16.msra.mxu0 %v105
    %125 = vmatprep.subr.bf16.mxu0 0
    %126 = vmatpush1.bf16.msra.mxu0 %v104
    %127 = vmatprep.subr.bf16.mxu0 0
    %128 = vmatpush1.bf16.msra.mxu0 %v103
    %129 = vmatprep.subr.bf16.mxu0 0
    %130 = vmatpush1.bf16.msra.mxu0 %v102
    %131 = vmatprep.subr.bf16.mxu0 0
    %132 = vmatpush1.bf16.msra.mxu0 %v101
    %133 = vmatprep.subr.bf16.mxu0 0
    %134 = vmatpush2.bf16.msra.mxu0 0
    %135 = vmatprep.subr.bf16.mxu0 0
    %136 = vmatpush2.bf16.msra.mxu0 0
    %137 = vmatprep.subr.bf16.mxu0 0
    %138 = vmatpush2.bf16.msra.mxu0 0
    %139 = vmatprep.subr.bf16.mxu0 0
    %140 = vmatpush2.bf16.msra.mxu0 0
    %141 = vmatprep.subr.bf16.mxu0 0
    %142 = vmatpush2.bf16.msra.mxu0 0
    %143 = vmatprep.subr.bf16.mxu0 0
    %144 = vmatpush2.bf16.msra.mxu0 0
    %145 = vmatprep.subr.bf16.mxu0 0
    %146 = vmatpush2.bf16.msra.mxu0 0
    %147 = vmatprep.subr.bf16.mxu0 0
    %148 = vmatpush2.bf16.msra.mxu0 0
    %149 = vmatprep.mubr.bf16.mxu0 0
    %150 = vmatmul.mubr.bf16.gmra.mxu0 %v59
    %v151 = vpop.f32.mrf.mxu0
    %v152 = vadd.f32 0.0, %v151
    %v153 = vpop.f32.mrf.mxu0
    %v154 = vpop.f32.mrf.mxu0
    %v155 = vadd.f32 0.0, %v154
    %v156 = vpop.f32.mrf.mxu0
    %157 = vmatprep.mubr.bf16.mxu0 0
    %158 = vmatmul.mubr.bf16.gmra.mxu0 %v60
    %v159 = vpop.f32.mrf.mxu0
    %v160 = vadd.f32 0.0, %v159
    %v161 = vpop.f32.mrf.mxu0
    %v162 = vpop.f32.mrf.mxu0
    %v163 = vadd.f32 0.0, %v162
    %v164 = vpop.f32.mrf.mxu0
    %165 = vmatprep.mubr.bf16.mxu0 0
    %166 = vmatmul.mubr.bf16.gmra.mxu0 %v61
    %v167 = vpop.f32.mrf.mxu0
    %v168 = vadd.f32 0.0, %v167
    %v169 = vpop.f32.mrf.mxu0
    %v170 = vpop.f32.mrf.mxu0
    %v171 = vadd.f32 0.0, %v170
    %v172 = vpop.f32.mrf.mxu0
    %173 = vmatprep.mubr.bf16.mxu0 0
    %174 = vmatmul.mubr.bf16.gmra.mxu0 %v62
    %v175 = vpop.f32.mrf.mxu0
    %v176 = vadd.f32 0.0, %v175
    %v177 = vpop.f32.mrf.mxu0
    %v178 = vpop.f32.mrf.mxu0
    %v179 = vadd.f32 0.0, %v178
    %v180 = vpop.f32.mrf.mxu0
    %181 = vmatprep.mubr.bf16.mxu0 0
    %182 = vmatmul.mubr.bf16.gmra.mxu0 %v63
    %v183 = vpop.f32.mrf.mxu0
    %v184 = vadd.f32 0.0, %v183
    %v185 = vpop.f32.mrf.mxu0
    %v186 = vpop.f32.mrf.mxu0
    %v187 = vadd.f32 0.0, %v186
    %v188 = vpop.f32.mrf.mxu0
    %189 = vdwg.mxu0
    %vm190 = vcmask 261120
    %191 = vst.msk [vmem:[#allocation2] sm:$0xff] %vm190, %v152
    %192 = vst.msk [vmem:[#allocation2 + $0x8] sm:$0xff] %vm190, %v155
    %193 = vst.msk [vmem:[#allocation2 + $0x10] sm:$0xff] %vm190, %v160
    %194 = vst.msk [vmem:[#allocation2 + $0x18] sm:$0xff] %vm190, %v163
    %195 = vst.msk [vmem:[#allocation2 + $0x20] sm:$0xff] %vm190, %v168
    %196 = vst.msk [vmem:[#allocation2 + $0x28] sm:$0xff] %vm190, %v171
    %197 = vst.msk [vmem:[#allocation2 + $0x30] sm:$0xff] %vm190, %v176
    %198 = vst.msk [vmem:[#allocation2 + $0x38] sm:$0xff] %vm190, %v179
    %199 = vst.msk [vmem:[#allocation2 + $0x40] sm:$0xff] %vm190, %v184
    %200 = vst.msk [vmem:[#allocation2 + $0x48] sm:$0xff] %vm190, %v187
    // Predicated region
    $region10: #{_encode_prompts_jit.1} parent=1 // pred_check
      _
    $region11: #{_encode_prompts_jit.1} parent=1 // pred_check_branch
      %202 = sbr.rel (0) target = $region13
    $region12: #{_encode_prompts_jit.1} parent=1 // pred_region
      %s204 = ssub.s32 1280, 1280
      %205 = vsyncadd [#allocation3], %s204
      %s206 = sshll.u32 [#allocation2], 4
      %s207 = int_to_ptr.vmem [resolvable:$true] %s206
      %212 = dma.vmem_to_hbm [thread:$0]  %s207, 1280, %s2, [#allocation3], 128, 128, 8
    $region13: #{_encode_prompts_jit.1} parent=1 // pred_fallthru
      _
    // Predicated region
    $region14: #{_encode_prompts_jit.1} parent=1 // pred_check
      _
    $region15: #{_encode_prompts_jit.1} parent=1 // pred_check_branch
      %214 = sbr.rel (0) target = $region17
    $region16: #{_encode_prompts_jit.1} parent=1 // pred_region
      %215 = dma.done [#allocation3], 1280
    $region17: #{_encode_prompts_jit.1} parent=1 // pred_fallthru
      _
    %216 = vsyncpa [#allocation3], 1

</llo_original>
